<compile_context>
chip_gen: v7x
topology: tpu7x:2x2x1
jax: 0.10.0
libtpu: 0.0.40
codegen_flags: <defaults>
</compile_context>

<pallas_src>
import functools

import jax
import jax.numpy as jnp
import numpy as np
from jax.experimental import pallas as pl
from jax.experimental.pallas import tpu as pltpu


def _round_up(x, m):
    return ((x + m - 1) // m) * m


def _yolo_head_kernel(x_ref, w_ref, b_ref, boxes_ref, confcls_ref, *,
                      anchors, stride, num_classes, width):
    """One grid step: 1x1 conv (matmul) + YOLO decode for one spatial tile.

    Shapes inside the kernel (spatial columns on lanes):
      x_ref       : (Cin,  tile)        f32   (cast to bf16 in-kernel for MXU)
      w_ref       : (Cout, Cin)         bf16  (resident)
      b_ref       : (Cout, 1)           f32   (resident)
      boxes_ref   : (4A,   tile)        f32   rows: a0:[x1,y1,x2,y2], a1:[...]
      confcls_ref : (A + A*C, tile)     bf16  rows: [A conf | A*C cls]
    """
    A = len(anchors)
    C = num_classes
    K = 5 + C
    s = float(stride)
    tile = x_ref.shape[-1]

    # 1x1 conv == channel matmul (MXU, bf16 inputs, f32 accumulation).
    x = x_ref[...].astype(jnp.bfloat16)
    pred = jnp.dot(w_ref[...], x, preferred_element_type=jnp.float32)
    pred = pred + b_ref[...]                                   # (Cout, tile)

    # Slab-wide sigmoid (xy / conf / cls rows); exp only on the 2A wh rows
    # below -- no slab-wide exp pass.
    sig = jax.nn.sigmoid(pred)

    # Per-column grid coordinates generated in-kernel (no HBM stream).
    # col < H*W (plus padding), so f32 integer arithmetic is exact; the +0.5
    # offset makes the floor robust to reciprocal rounding.
    col = (jax.lax.broadcasted_iota(jnp.int32, (1, tile), 1)
           + pl.program_id(1) * tile).astype(jnp.float32)
    gy = jnp.floor((col + 0.5) * (1.0 / float(width)))
    gx = col - gy * float(width)

    box_rows = []
    conf_rows = []
    cls_rows = []
    for a in range(A):                       # A is tiny and static (2-3)
        base = a * K
        half_w = float(anchors[a][0]) * 0.5  # anchor*0.5 folded into constant
        half_h = float(anchors[a][1]) * 0.5

        cx = (sig[base + 0:base + 1, :] + gx) * s            # (1, tile)
        cy = (sig[base + 1:base + 2, :] + gy) * s
        hx = jnp.exp(pred[base + 2:base + 3, :]) * half_w    # exp on wh rows only
        hy = jnp.exp(pred[base + 3:base + 4, :]) * half_h

        box_rows += [cx - hx, cy - hy, cx + hx, cy + hy]      # x1, y1, x2, y2
        conf_rows.append(sig[base + 4:base + 5, :])
        cls_rows.append(sig[base + 5:base + K, :])

    # One full-block store per output ref (no partial-sublane masked stores).
    boxes_ref[...] = jnp.concatenate(box_rows, axis=0)
    confcls_ref[...] = jnp.concatenate(conf_rows + cls_rows, axis=0).astype(
        confcls_ref.dtype)


def yolo_head_pallas(x_nchw, conv_w, conv_b, anchors, stride, num_classes, *,
                     tile_m=1024):
    """
    x_nchw : (B, Cin, H, W)   float32 (PyTorch NCHW convention)
    conv_w : (Cout, Cin)      1x1 conv weight squeezed (PyTorch [Cout,Cin,1,1])
    conv_b : (Cout,)
    Returns (pred_boxes, pred_conf, pred_cls) with PyTorch shapes:
      (B, A, H, W, 4) f32, (B, A, H, W, 1) bf16, (B, A, H, W, C) bf16.
    """
    B, Cin, H, W = x_nchw.shape
    A = len(anchors)
    C = num_classes
    K = 5 + C
    Cout = A * K
    assert conv_w.shape == (Cout, Cin)
    HW = H * W

    # VMEM-aware tile cap: double-buffered per-step working set must fit the
    # smallest scoped-VMEM default (16 MiB on v5e; 32 MiB on v6e/v7x).
    bytes_per_col = (2 * (Cin * 4 + 4 * A * 4 + (A + A * C) * 2)   # dbl-buffered I/O
                     + 3 * Cout * 4 + Cin * 2)                      # in-kernel temps
    fixed = 2 * (Cout * Cin * 2 + Cout * 4)
    cap = max(128, (12 * 1024 * 1024 - fixed) // bytes_per_col)

    tile_pref = max(128, min(int(tile_m), int(cap)))
    if HW <= tile_pref:
        tile_hw, HWp = HW, HW            # single full-width spatial block, no pad
    else:
        tile_hw = (tile_pref // 128) * 128
        HWp = _round_up(HW, tile_hw)     # pad only when lane tiling is needed

    # Glue: reshape-only view of x (no transpose, no cast, no copy).
    x_r = x_nchw.reshape(B, Cin, HW)
    if HWp != HW:
        x_r = jnp.pad(x_r, ((0, 0), (0, 0), (0, HWp - HW)))
    w_mat = conv_w.astype(jnp.bfloat16)                  # (Cout, Cin), tiny
    b_mat = conv_b.reshape(Cout, 1).astype(jnp.float32)  # (Cout, 1)

    n_hw = HWp // tile_hw
    grid = (B, n_hw)

    kernel = functools.partial(
        _yolo_head_kernel,
        anchors=anchors, stride=stride, num_classes=num_classes, width=W)

    cost = pl.CostEstimate(
        flops=2 * B * HWp * Cin * Cout,
        transcendentals=(Cout + 2 * A) * B * HWp,
        bytes_accessed=(B * Cin * HWp * 4 + Cout * Cin * 2 + Cout * 4
                        + B * 4 * A * HWp * 4 + B * (A + A * C) * HWp * 2),
    )

    boxes_o, confcls_o = pl.pallas_call(
        kernel,
        out_shape=(
            jax.ShapeDtypeStruct((B, 4 * A, HWp), jnp.float32),
            jax.ShapeDtypeStruct((B, A + A * C, HWp), jnp.bfloat16),
        ),
        grid_spec=pltpu.PrefetchScalarGridSpec(
            num_scalar_prefetch=0,
            grid=grid,
            in_specs=[
                pl.BlockSpec((None, Cin, tile_hw), lambda b, i: (b, 0, i)),  # x
                pl.BlockSpec((Cout, Cin), lambda b, i: (0, 0)),              # weight
                pl.BlockSpec((Cout, 1), lambda b, i: (0, 0)),                # bias
            ],
            out_specs=[
                pl.BlockSpec((None, 4 * A, tile_hw), lambda b, i: (b, 0, i)),
                pl.BlockSpec((None, A + A * C, tile_hw), lambda b, i: (b, 0, i)),
            ],
        ),
        compiler_params=pltpu.CompilerParams(
            dimension_semantics=("parallel", "parallel")),
        cost_estimate=cost,
    )(x_r, w_mat, b_mat)

    # Glue: strip spatial padding, restore PyTorch output layout.
    boxes_o = boxes_o[:, :, :HW]
    confcls_o = confcls_o[:, :, :HW]
    boxes = boxes_o.reshape(B, A, 4, H, W).transpose(0, 1, 3, 4, 2)
    conf = confcls_o[:, :A].reshape(B, A, 1, H, W).transpose(0, 1, 3, 4, 2)
    cls = confcls_o[:, A:].reshape(B, A, C, H, W).transpose(0, 1, 3, 4, 2)
    return boxes, conf, cls


def yolo_head_reference(x_nchw, conv_w, conv_b, anchors, stride, num_classes,
                        matmul_dtype=None):
    """Pure-JAX replica of the PyTorch forward.

    If matmul_dtype is given, the 1x1-conv inputs are cast to that dtype
    (f32 accumulation), matching the kernel's matmul precision.
    """
    B, Cin, H, W = x_nchw.shape
    A = len(anchors)
    anchors_arr = jnp.asarray(anchors, dtype=jnp.float32).reshape(A, 2)

    xm = x_nchw if matmul_dtype is None else x_nchw.astype(matmul_dtype)
    wm = conv_w if matmul_dtype is None else conv_w.astype(matmul_dtype)
    pred = jnp.einsum('bchw,oc->bohw', xm, wm,
                      preferred_element_type=jnp.float32)
    pred = pred + conv_b.astype(jnp.float32)[None, :, None, None]
    pred = pred.reshape(B, A, 5 + num_classes, H, W).transpose(0, 1, 3, 4, 2)

    pred_conf = jax.nn.sigmoid(pred[..., 4:5])
    pred_cls = jax.nn.sigmoid(pred[..., 5:])
    pred_xy = jax.nn.sigmoid(pred[..., :2])
    pred_wh = jnp.exp(pred[..., 2:4])

    gy, gx = jnp.meshgrid(jnp.arange(H), jnp.arange(W), indexing='ij')
    grid = jnp.stack((gx, gy), axis=2).reshape(1, 1, H, W, 2).astype(jnp.float32)

    pred_xy = (pred_xy + grid) * stride
    pred_wh = pred_wh * anchors_arr.reshape(1, A, 1, 1, 2)
    x1y1 = pred_xy - pred_wh / 2
    x2y2 = pred_xy + pred_wh / 2
    boxes = jnp.concatenate([x1y1, x2y2], axis=-1)
    return boxes, pred_conf, pred_cls


def _run_case(B, Cin, H, W, num_classes, anchors, stride, tile_m, key):
    A = len(anchors)
    Cout = A * (5 + num_classes)
    kx, kw, kb = jax.random.split(key, 3)
    x = jax.random.normal(kx, (B, Cin, H, W), dtype=jnp.float32)
    conv_w = jax.random.normal(kw, (Cout, Cin), dtype=jnp.float32) * 0.05
    conv_b = jax.random.normal(kb, (Cout,), dtype=jnp.float32) * 0.05

    boxes, conf, cls = jax.block_until_ready(
        yolo_head_pallas(x, conv_w, conv_b, anchors, stride, num_classes,
                         tile_m=tile_m))

    assert boxes.shape == (B, A, H, W, 4)
    assert conf.shape == (B, A, H, W, 1)
    assert cls.shape == (B, A, H, W, num_classes)

    boxes_f = np.asarray(boxes, dtype=np.float32)
    conf_f = np.asarray(jnp.asarray(conf, dtype=jnp.float32))
    cls_f = np.asarray(jnp.asarray(cls, dtype=jnp.float32))

    # Tight check vs. a reference running the conv at the same (bf16-input,
    # f32-accumulate) precision as the kernel.  conf/cls tolerance includes
    # their bf16 output quantization (~4e-3 abs on probabilities).
    rb, rc, rcls = yolo_head_reference(x, conv_w, conv_b, anchors, stride,
                                       num_classes, matmul_dtype=jnp.bfloat16)
    np.testing.assert_allclose(boxes_f, np.asarray(rb), rtol=1e-3, atol=2e-2)
    np.testing.assert_allclose(conf_f, np.asarray(rc), rtol=2e-2, atol=8e-3)
    np.testing.assert_allclose(cls_f, np.asarray(rcls), rtol=2e-2, atol=8e-3)

    # Loose sanity check vs. the full-f32 PyTorch-equivalent reference
    # (bf16 conv inputs introduce ~1e-2-scale pred error, amplified by exp()).
    fb, fc, fcls = yolo_head_reference(x, conv_w, conv_b, anchors, stride,
                                       num_classes)
    np.testing.assert_allclose(boxes_f, np.asarray(fb), rtol=0.05, atol=2.0)
    np.testing.assert_allclose(conf_f, np.asarray(fc), rtol=0.05, atol=0.02)
    np.testing.assert_allclose(cls_f, np.asarray(fcls), rtol=0.05, atol=0.02)


if __name__ == "__main__":
    key = jax.random.PRNGKey(0)
    k1, k2, k3 = jax.random.split(key, 3)

    # Case 1: HW=256 (128-multiple), grid=(B=2, 1) -> 2 parallel steps
    # (exercises megacore sharding via the batch axis on v7x).
    _run_case(B=2, Cin=32, H=16, W=16, num_classes=3,
              anchors=[(10.0, 13.0), (16.0, 30.0), (33.0, 23.0)],
              stride=8, tile_m=256, key=k1)

    # Case 2: HW=63 (not a 128-multiple) -> single full-width spatial block,
    # no padding, exercises the odd-size path.
    _run_case(B=1, Cin=16, H=7, W=9, num_classes=3,
              anchors=[(30.0, 61.0), (62.0, 45.0)],
              stride=16, tile_m=1024, key=k2)

    # Case 3: HW=400 with tile_m=128 -> lane tiling + padding path
    # (HWp=512, spatial grid of 4).
    _run_case(B=1, Cin=8, H=20, W=20, num_classes=2,
              anchors=[(10.0, 13.0), (33.0, 23.0)],
              stride=8, tile_m=128, key=k3)

    print("KERNEL_OK")
</pallas_src>

<mosaic_0001>
module attributes {stable_mosaic.version = 11 : i64} {
  func.func @_yolo_head_kernel(%arg0: i32, %arg1: i32, %arg2: memref<1x32x256xf32, #tpu.memory_space<vmem>>, %arg3: memref<24x32xbf16, #tpu.memory_space<vmem>>, %arg4: memref<24x1xf32, #tpu.memory_space<vmem>>, %arg5: memref<1x12x256xf32, #tpu.memory_space<vmem>>, %arg6: memref<1x12x256xbf16, #tpu.memory_space<vmem>>) attributes {dimension_semantics = [#tpu.dimension_semantics<parallel>, #tpu.dimension_semantics<parallel>], iteration_bounds = array<i64: 2, 1>, scalar_prefetch = 0 : i64, scratch_operands = 0 : i64, tpu.core_type = #tpu.core_type<tc>, window_params = [{transform_indices = @transform_0, window_bounds = array<i64: 1, 32, 256>}, {pipeline_mode = #tpu.pipeline_mode<synchronous>, transform_indices = @transform_1, window_bounds = array<i64: 24, 32>}, {pipeline_mode = #tpu.pipeline_mode<synchronous>, transform_indices = @transform_2, window_bounds = array<i64: 24, 1>}, {transform_indices = @transform_3, window_bounds = array<i64: 1, 12, 256>}, {transform_indices = @transform_4, window_bounds = array<i64: 1, 12, 256>}]} {
    %c0 = arith.constant 0 : index
    %c0_0 = arith.constant 0 : index
    %c0_1 = arith.constant 0 : index
    %0 = vector.load %arg2[%c0, %c0_0, %c0_1] : memref<1x32x256xf32, #tpu.memory_space<vmem>>, vector<1x32x256xf32>
    %1 = vector.shape_cast %0 : vector<1x32x256xf32> to vector<32x256xf32>
    %2 = arith.truncf %1 : vector<32x256xf32> to vector<32x256xbf16>
    %c0_2 = arith.constant 0 : index
    %c0_3 = arith.constant 0 : index
    %3 = vector.load %arg3[%c0_2, %c0_3] : memref<24x32xbf16, #tpu.memory_space<vmem>>, vector<24x32xbf16>
    %cst = arith.constant dense<0.000000e+00> : vector<24x256xf32>
    %4 = tpu.matmul %3, %2, %cst {dimension_numbers = #tpu.dot_dimension_numbers<[1], [0], [0], [1], [0, 0, 1, 1], [], []>} : vector<24x32xbf16>, vector<32x256xbf16>, vector<24x256xf32> -> vector<24x256xf32>
    %c0_4 = arith.constant 0 : index
    %c0_5 = arith.constant 0 : index
    %5 = vector.load %arg4[%c0_4, %c0_5] : memref<24x1xf32, #tpu.memory_space<vmem>>, vector<24x1xf32>
    %6 = vector.broadcast %5 : vector<24x1xf32> to vector<24x256xf32>
    %7 = arith.addf %4, %6 : vector<24x256xf32>
    %8 = arith.negf %7 : vector<24x256xf32>
    %9 = math.exp %8 : vector<24x256xf32>
    %cst_6 = arith.constant 1.000000e+00 : f32
    %10 = vector.broadcast %cst_6 : f32 to vector<24x256xf32>
    %11 = arith.addf %10, %9 : vector<24x256xf32>
    %12 = arith.divf %10, %11 : vector<24x256xf32>
    %13 = tpu.iota {dimensions = array<i32: 1>} : vector<1x256xi32>
    %c256_i32 = arith.constant 256 : i32
    %14 = arith.muli %arg1, %c256_i32 : i32
    %15 = vector.broadcast %14 : i32 to vector<1x256xi32>
    %16 = arith.addi %13, %15 : vector<1x256xi32>
    %17 = arith.sitofp %16 : vector<1x256xi32> to vector<1x256xf32>
    %cst_7 = arith.constant 5.000000e-01 : f32
    %18 = vector.broadcast %cst_7 : f32 to vector<1x256xf32>
    %19 = arith.addf %17, %18 : vector<1x256xf32>
    %cst_8 = arith.constant 6.250000e-02 : f32
    %20 = vector.broadcast %cst_8 : f32 to vector<1x256xf32>
    %21 = arith.mulf %19, %20 : vector<1x256xf32>
    %22 = math.floor %21 : vector<1x256xf32>
    %cst_9 = arith.constant 1.600000e+01 : f32
    %23 = vector.broadcast %cst_9 : f32 to vector<1x256xf32>
    %24 = arith.mulf %22, %23 : vector<1x256xf32>
    %25 = arith.subf %17, %24 : vector<1x256xf32>
    %26 = vector.extract_strided_slice %12 {offsets = [0, 0], sizes = [1, 256], strides = [1, 1]} : vector<24x256xf32> to vector<1x256xf32>
    %27 = arith.addf %26, %25 : vector<1x256xf32>
    %cst_10 = arith.constant 8.000000e+00 : f32
    %28 = vector.broadcast %cst_10 : f32 to vector<1x256xf32>
    %29 = arith.mulf %27, %28 : vector<1x256xf32>
    %30 = vector.extract_strided_slice %12 {offsets = [1, 0], sizes = [1, 256], strides = [1, 1]} : vector<24x256xf32> to vector<1x256xf32>
    %31 = arith.addf %30, %22 : vector<1x256xf32>
    %cst_11 = arith.constant 8.000000e+00 : f32
    %32 = vector.broadcast %cst_11 : f32 to vector<1x256xf32>
    %33 = arith.mulf %31, %32 : vector<1x256xf32>
    %34 = vector.extract_strided_slice %7 {offsets = [2, 0], sizes = [1, 256], strides = [1, 1]} : vector<24x256xf32> to vector<1x256xf32>
    %35 = math.exp %34 : vector<1x256xf32>
    %cst_12 = arith.constant 5.000000e+00 : f32
    %36 = vector.broadcast %cst_12 : f32 to vector<1x256xf32>
    %37 = arith.mulf %35, %36 : vector<1x256xf32>
    %38 = vector.extract_strided_slice %7 {offsets = [3, 0], sizes = [1, 256], strides = [1, 1]} : vector<24x256xf32> to vector<1x256xf32>
    %39 = math.exp %38 : vector<1x256xf32>
    %cst_13 = arith.constant 6.500000e+00 : f32
    %40 = vector.broadcast %cst_13 : f32 to vector<1x256xf32>
    %41 = arith.mulf %39, %40 : vector<1x256xf32>
    %42 = arith.subf %29, %37 : vector<1x256xf32>
    %43 = arith.subf %33, %41 : vector<1x256xf32>
    %44 = arith.addf %29, %37 : vector<1x256xf32>
    %45 = arith.addf %33, %41 : vector<1x256xf32>
    %46 = vector.extract_strided_slice %12 {offsets = [4, 0], sizes = [1, 256], strides = [1, 1]} : vector<24x256xf32> to vector<1x256xf32>
    %47 = vector.extract_strided_slice %12 {offsets = [5, 0], sizes = [3, 256], strides = [1, 1]} : vector<24x256xf32> to vector<3x256xf32>
    %48 = vector.extract_strided_slice %12 {offsets = [8, 0], sizes = [1, 256], strides = [1, 1]} : vector<24x256xf32> to vector<1x256xf32>
    %49 = arith.addf %48, %25 : vector<1x256xf32>
    %cst_14 = arith.constant 8.000000e+00 : f32
    %50 = vector.broadcast %cst_14 : f32 to vector<1x256xf32>
    %51 = arith.mulf %49, %50 : vector<1x256xf32>
    %52 = vector.extract_strided_slice %12 {offsets = [9, 0], sizes = [1, 256], strides = [1, 1]} : vector<24x256xf32> to vector<1x256xf32>
    %53 = arith.addf %52, %22 : vector<1x256xf32>
    %cst_15 = arith.constant 8.000000e+00 : f32
    %54 = vector.broadcast %cst_15 : f32 to vector<1x256xf32>
    %55 = arith.mulf %53, %54 : vector<1x256xf32>
    %56 = vector.extract_strided_slice %7 {offsets = [10, 0], sizes = [1, 256], strides = [1, 1]} : vector<24x256xf32> to vector<1x256xf32>
    %57 = math.exp %56 : vector<1x256xf32>
    %cst_16 = arith.constant 8.000000e+00 : f32
    %58 = vector.broadcast %cst_16 : f32 to vector<1x256xf32>
    %59 = arith.mulf %57, %58 : vector<1x256xf32>
    %60 = vector.extract_strided_slice %7 {offsets = [11, 0], sizes = [1, 256], strides = [1, 1]} : vector<24x256xf32> to vector<1x256xf32>
    %61 = math.exp %60 : vector<1x256xf32>
    %cst_17 = arith.constant 1.500000e+01 : f32
    %62 = vector.broadcast %cst_17 : f32 to vector<1x256xf32>
    %63 = arith.mulf %61, %62 : vector<1x256xf32>
    %64 = arith.subf %51, %59 : vector<1x256xf32>
    %65 = arith.subf %55, %63 : vector<1x256xf32>
    %66 = arith.addf %51, %59 : vector<1x256xf32>
    %67 = arith.addf %55, %63 : vector<1x256xf32>
    %68 = vector.extract_strided_slice %12 {offsets = [12, 0], sizes = [1, 256], strides = [1, 1]} : vector<24x256xf32> to vector<1x256xf32>
    %69 = vector.extract_strided_slice %12 {offsets = [13, 0], sizes = [3, 256], strides = [1, 1]} : vector<24x256xf32> to vector<3x256xf32>
    %70 = vector.extract_strided_slice %12 {offsets = [16, 0], sizes = [1, 256], strides = [1, 1]} : vector<24x256xf32> to vector<1x256xf32>
    %71 = arith.addf %70, %25 : vector<1x256xf32>
    %cst_18 = arith.constant 8.000000e+00 : f32
    %72 = vector.broadcast %cst_18 : f32 to vector<1x256xf32>
    %73 = arith.mulf %71, %72 : vector<1x256xf32>
    %74 = vector.extract_strided_slice %12 {offsets = [17, 0], sizes = [1, 256], strides = [1, 1]} : vector<24x256xf32> to vector<1x256xf32>
    %75 = arith.addf %74, %22 : vector<1x256xf32>
    %cst_19 = arith.constant 8.000000e+00 : f32
    %76 = vector.broadcast %cst_19 : f32 to vector<1x256xf32>
    %77 = arith.mulf %75, %76 : vector<1x256xf32>
    %78 = vector.extract_strided_slice %7 {offsets = [18, 0], sizes = [1, 256], strides = [1, 1]} : vector<24x256xf32> to vector<1x256xf32>
    %79 = math.exp %78 : vector<1x256xf32>
    %cst_20 = arith.constant 1.650000e+01 : f32
    %80 = vector.broadcast %cst_20 : f32 to vector<1x256xf32>
    %81 = arith.mulf %79, %80 : vector<1x256xf32>
    %82 = vector.extract_strided_slice %7 {offsets = [19, 0], sizes = [1, 256], strides = [1, 1]} : vector<24x256xf32> to vector<1x256xf32>
    %83 = math.exp %82 : vector<1x256xf32>
    %cst_21 = arith.constant 1.150000e+01 : f32
    %84 = vector.broadcast %cst_21 : f32 to vector<1x256xf32>
    %85 = arith.mulf %83, %84 : vector<1x256xf32>
    %86 = arith.subf %73, %81 : vector<1x256xf32>
    %87 = arith.subf %77, %85 : vector<1x256xf32>
    %88 = arith.addf %73, %81 : vector<1x256xf32>
    %89 = arith.addf %77, %85 : vector<1x256xf32>
    %90 = vector.extract_strided_slice %12 {offsets = [20, 0], sizes = [1, 256], strides = [1, 1]} : vector<24x256xf32> to vector<1x256xf32>
    %91 = vector.extract_strided_slice %12 {offsets = [21, 0], sizes = [3, 256], strides = [1, 1]} : vector<24x256xf32> to vector<3x256xf32>
    %92 = tpu.concatenate %42, %43, %44, %45, %64, %65, %66, %67, %86, %87, %88, %89 in 0 : vector<1x256xf32>, vector<1x256xf32>, vector<1x256xf32>, vector<1x256xf32>, vector<1x256xf32>, vector<1x256xf32>, vector<1x256xf32>, vector<1x256xf32>, vector<1x256xf32>, vector<1x256xf32>, vector<1x256xf32>, vector<1x256xf32> -> vector<12x256xf32>
    %c0_22 = arith.constant 0 : index
    %c0_23 = arith.constant 0 : index
    %c0_24 = arith.constant 0 : index
    %93 = vector.load %arg5[%c0_22, %c0_23, %c0_24] : memref<1x12x256xf32, #tpu.memory_space<vmem>>, vector<1x12x256xf32>
    %94 = vector.shape_cast %93 : vector<1x12x256xf32> to vector<12x256xf32>
    %95 = vector.shape_cast %92 : vector<12x256xf32> to vector<1x12x256xf32>
    tpu.vector_store %arg5[%c0_22, %c0_23, %c0_24], %95 {strides = array<i32>} : memref<1x12x256xf32, #tpu.memory_space<vmem>>, vector<1x12x256xf32>,
    %96 = tpu.concatenate %46, %68, %90, %47, %69, %91 in 0 : vector<1x256xf32>, vector<1x256xf32>, vector<1x256xf32>, vector<3x256xf32>, vector<3x256xf32>, vector<3x256xf32> -> vector<12x256xf32>
    %97 = arith.truncf %96 : vector<12x256xf32> to vector<12x256xbf16>
    %c0_25 = arith.constant 0 : index
    %c0_26 = arith.constant 0 : index
    %c0_27 = arith.constant 0 : index
    %98 = vector.load %arg6[%c0_25, %c0_26, %c0_27] : memref<1x12x256xbf16, #tpu.memory_space<vmem>>, vector<1x12x256xbf16>
    %99 = vector.shape_cast %98 : vector<1x12x256xbf16> to vector<12x256xbf16>
    %100 = vector.shape_cast %97 : vector<12x256xbf16> to vector<1x12x256xbf16>
    tpu.vector_store %arg6[%c0_25, %c0_26, %c0_27], %100 {strides = array<i32>} : memref<1x12x256xbf16, #tpu.memory_space<vmem>>, vector<1x12x256xbf16>,
    return
  }
  func.func @transform_0(%arg0: i32, %arg1: i32) -> (i32, i32, i32) {
    %c0_i32 = arith.constant 0 : i32
    %c0_i32_0 = arith.constant 0 : i32
    return %arg0, %c0_i32, %arg1 : i32, i32, i32
  }
  func.func @transform_1(%arg0: i32, %arg1: i32) -> (i32, i32) {
    %c0_i32 = arith.constant 0 : i32
    %c0_i32_0 = arith.constant 0 : i32
    %c0_i32_1 = arith.constant 0 : i32
    return %c0_i32, %c0_i32_0 : i32, i32
  }
  func.func @transform_2(%arg0: i32, %arg1: i32) -> (i32, i32) {
    %c0_i32 = arith.constant 0 : i32
    %c0_i32_0 = arith.constant 0 : i32
    %c0_i32_1 = arith.constant 0 : i32
    return %c0_i32, %c0_i32_0 : i32, i32
  }
  func.func @transform_3(%arg0: i32, %arg1: i32) -> (i32, i32, i32) {
    %c0_i32 = arith.constant 0 : i32
    %c0_i32_0 = arith.constant 0 : i32
    return %arg0, %c0_i32, %arg1 : i32, i32, i32
  }
  func.func @transform_4(%arg0: i32, %arg1: i32) -> (i32, i32, i32) {
    %c0_i32 = arith.constant 0 : i32
    %c0_i32_0 = arith.constant 0 : i32
    return %arg0, %c0_i32, %arg1 : i32, i32, i32
  }
}

</mosaic_0001>

<llo_original>
// kernel: tpu_custom_call.1
$region0: #{tpu_custom_call.1}
  #allocation0 [shape = 'u32[]', space=smem, size = 0x4, offset = 0x4, fixed_abs, tag = 'smem constant byte address 0x4 - core index']
  #allocation1 [shape = 'u32[144,128]{1,0:T(1,128)}', space=vmem, size = 0x12000, scoped, tag = 'internal scratch']
  %s0 = inlined_call_operand.hbm [shape: f32[2,32,256], index: 0, kind: input, shape index: {}]
  %s1 = inlined_call_operand.vmem [shape: bf16[24,32], index: 1, kind: input, shape index: {}]
  %s2 = inlined_call_operand.vmem [shape: f32[24,1], index: 2, kind: input, shape index: {}]
  %s3 = inlined_call_operand.vmem [shape: f32[2,12,256], index: 3, kind: output, shape index: {0}]
  %s4 = inlined_call_operand.vmem [shape: bf16[2,12,256], index: 4, kind: output, shape index: {1}]
  %5 = xla_tuple %s3, %s4
  %s6 = sld [smem:[#allocation0]]
  $region57: #{tpu_custom_call.1} parent=0
    _
  %s8 = ssub.s32 1, %s6
  %s9 = scalar_select 0, %s8, %s6
  $region1: #{tpu_custom_call.1} parent=0
    #allocation2 [shape = 'u8[65536]{0}', space=vmem, size = 0x10000, scoped, tag = 'input window, operand 0']
    #allocation3 [shape = 's32[2]{0}', space=sflag, size = 0x8, scoped, tag = 'scoped memory for tpu_custom_call.1']
    %10 = vsyncpa [#allocation3], 0
    %s11 = scalar_lea.sflag [#allocation3], 1
    %12 = vsyncpa %s11, 0
    loop: start=0, step=1, limit=4
    $region2: #{tpu_custom_call.1} parent=1 // loop_pre_header
      _
    $region3: #{tpu_custom_call.1} parent=1 // loop_header
      %s14 = sphi 0, %s18
      %p15 = scmp.ge.s32.totalorder %s14, 4
      %s21 = sphi 0, %s33
      %s22 = sphi 0, %s29
      %s23 = sphi 0, %s21
      %s24 = sphi 0, %s22
      %s25 = sphi 0, %s23
      %s26 = sphi 0, %s24
      %s38 = sphi 0, %s40
      %s41 = sphi 0, %s38
      %s42 = sphi 0, %s41
      %s58 = sphi 0, %s42
      %s62 = sphi 0, %s62
      %s64 = sphi 0, %s62
      %s65 = sphi 0, %s64
      %s79 = sphi 0, %s65
      %s83 = sphi 0, %s83
      %s85 = sphi 0, %s83
      %s86 = sphi 0, %s85
      %s100 = sphi 0, %s86
      %s108 = sphi 0, %s110
      %s111 = sphi 0, %s108
      %s112 = sphi 0, %s111
      %s128 = sphi 0, %s112
      %s136 = sphi 0, %s138
      %s139 = sphi 0, %s136
      %s140 = sphi 0, %s139
      %s156 = sphi 0, %s140
    $region4: #{tpu_custom_call.1} parent=1 // loop_header_branch
      %17 = sbr.rel (%p15) target = $region8
    $region5: #{tpu_custom_call.1} parent=1 // loop_body
      %s19 = ssub.s32 %s14, 1
      %s20 = ssub.s32 %s14, 2
      %s27 = sadd.s32 1, %s22
      %p28 = scmp.ge.s32.totalorder %s27, 1
      %s29 = scalar_select %p28, 0, %s27
      %s30 = sadd.s32 1, %s21
      %s31 = scalar_select %p28, %s30, %s21
      %p32 = scmp.ge.s32.totalorder %s31, 2
      %s33 = scalar_select %p32, 0, %s31
      %s34 = ssub.s32 %s21, %s33
      %s35 = ssub.s32 %s22, %s29
      %s36 = sor.u32 %s34, %s35
      %p37 = scmp.eq.s32.totalorder %s36, 0
      %s39 = sadd.s32 %s38, 1
      %s40 = scalar_select %p37, %s38, %s39
      %p43 = pneg %p37
      %p44 = scmp.eq.s32.totalorder %s14, 1
      %p45 = por %p43, %p44
      %p46 = scmp.ne.s32.totalorder %s38, %s41
      %p47 = scmp.eq.s32.totalorder %s14, 0
      %p48 = por %p46, %p47
      %p49 = scmp.ne.s32.totalorder %s38, %s41
      %p50 = scmp.eq.s32.totalorder %s19, 1
      %p51 = por %p49, %p50
      %p52 = scmp.ne.s32.totalorder %s41, %s42
      %p53 = scmp.eq.s32.totalorder %s19, 0
      %p54 = por %p52, %p53
      %p55 = scmp.ne.s32.totalorder %s41, %s42
      %p56 = scmp.eq.s32.totalorder %s20, 1
      %p57 = por %p55, %p56
      %p59 = scmp.ne.s32.totalorder %s42, %s58
      %p60 = scmp.eq.s32.totalorder %s20, 0
      %p61 = por %p59, %p60
      %s63 = sadd.s32 %s62, 1
      %p66 = scmp.eq.s32.totalorder %s14, 1
      %p67 = scmp.ne.s32.totalorder %s62, %s64
      %p68 = scmp.eq.s32.totalorder %s14, 0
      %p69 = por %p67, %p68
      %p70 = scmp.ne.s32.totalorder %s62, %s64
      %p71 = scmp.eq.s32.totalorder %s19, 1
      %p72 = por %p70, %p71
      %p73 = scmp.ne.s32.totalorder %s64, %s65
      %p74 = scmp.eq.s32.totalorder %s19, 0
      %p75 = por %p73, %p74
      %p76 = scmp.ne.s32.totalorder %s64, %s65
      %p77 = scmp.eq.s32.totalorder %s20, 1
      %p78 = por %p76, %p77
      %p80 = scmp.ne.s32.totalorder %s65, %s79
      %p81 = scmp.eq.s32.totalorder %s20, 0
      %p82 = por %p80, %p81
      %s84 = sadd.s32 %s83, 1
      %p87 = scmp.eq.s32.totalorder %s14, 1
      %p88 = scmp.ne.s32.totalorder %s83, %s85
      %p89 = scmp.eq.s32.totalorder %s14, 0
      %p90 = por %p88, %p89
      %p91 = scmp.ne.s32.totalorder %s83, %s85
      %p92 = scmp.eq.s32.totalorder %s19, 1
      %p93 = por %p91, %p92
      %p94 = scmp.ne.s32.totalorder %s85, %s86
      %p95 = scmp.eq.s32.totalorder %s19, 0
      %p96 = por %p94, %p95
      %p97 = scmp.ne.s32.totalorder %s85, %s86
      %p98 = scmp.eq.s32.totalorder %s20, 1
      %p99 = por %p97, %p98
      %p101 = scmp.ne.s32.totalorder %s86, %s100
      %p102 = scmp.eq.s32.totalorder %s20, 0
      %p103 = por %p101, %p102
      %s104 = ssub.s32 %s21, %s33
      %s105 = ssub.s32 %s22, %s29
      %s106 = sor.u32 %s104, %s105
      %p107 = scmp.eq.s32.totalorder %s106, 0
      %s109 = sadd.s32 %s108, 1
      %s110 = scalar_select %p107, %s108, %s109
      %p113 = pneg %p107
      %p114 = scmp.eq.s32.totalorder %s14, 1
      %p115 = por %p113, %p114
      %p116 = scmp.ne.s32.totalorder %s108, %s111
      %p117 = scmp.eq.s32.totalorder %s14, 0
      %p118 = por %p116, %p117
      %p119 = scmp.ne.s32.totalorder %s108, %s111
      %p120 = scmp.eq.s32.totalorder %s19, 1
      %p121 = por %p119, %p120
      %p122 = scmp.ne.s32.totalorder %s111, %s112
      %p123 = scmp.eq.s32.totalorder %s19, 0
      %p124 = por %p122, %p123
      %p125 = scmp.ne.s32.totalorder %s111, %s112
      %p126 = scmp.eq.s32.totalorder %s20, 1
      %p127 = por %p125, %p126
      %p129 = scmp.ne.s32.totalorder %s112, %s128
      %p130 = scmp.eq.s32.totalorder %s20, 0
      %p131 = por %p129, %p130
      %s132 = ssub.s32 %s21, %s33
      %s133 = ssub.s32 %s22, %s29
      %s134 = sor.u32 %s132, %s133
      %p135 = scmp.eq.s32.totalorder %s134, 0
      %s137 = sadd.s32 %s136, 1
      %s138 = scalar_select %p135, %s136, %s137
      %p141 = pneg %p135
      %p142 = scmp.eq.s32.totalorder %s14, 1
      %p143 = por %p141, %p142
      %p144 = scmp.ne.s32.totalorder %s136, %s139
      %p145 = scmp.eq.s32.totalorder %s14, 0
      %p146 = por %p144, %p145
      %p147 = scmp.ne.s32.totalorder %s136, %s139
      %p148 = scmp.eq.s32.totalorder %s19, 1
      %p149 = por %p147, %p148
      %p150 = scmp.ne.s32.totalorder %s139, %s140
      %p151 = scmp.eq.s32.totalorder %s19, 0
      %p152 = por %p150, %p151
      %p153 = scmp.ne.s32.totalorder %s139, %s140
      %p154 = scmp.eq.s32.totalorder %s20, 1
      %p155 = por %p153, %p154
      %p157 = scmp.ne.s32.totalorder %s140, %s156
      %p158 = scmp.eq.s32.totalorder %s20, 0
      %p159 = por %p157, %p158
      %p160 = scmp.le.s32.totalorder 1, %s14
      %p161 = scmp.lt.s32.totalorder %s14, 3
      %p162 = pnand %p160, %p161
      %p163 = pneg %p162
      // Predicated region
      $region9: #{tpu_custom_call.1} parent=5 // pred_check
        _
      $region10: #{tpu_custom_call.1} parent=5 // pred_check_branch
        %165 = sbr.rel (%p162) target = $region12
      $region11: #{tpu_custom_call.1} parent=5 // pred_region
        %s166 = ssub.s32 %s14, 1
        // Predicated region
        $region13: #{tpu_custom_call.1} parent=11 // pred_check
          %p167 = pneg %p75
        $region14: #{tpu_custom_call.1} parent=11 // pred_check_branch
          %169 = sbr.rel (%p167) target = $region16
        $region15: #{tpu_custom_call.1} parent=11 // pred_region
          _
        $region16: #{tpu_custom_call.1} parent=11 // pred_fallthru
          _
        // Predicated region
        $region17: #{tpu_custom_call.1} parent=11 // pred_check
          %p170 = pneg %p96
        $region18: #{tpu_custom_call.1} parent=11 // pred_check_branch
          %172 = sbr.rel (%p170) target = $region20
        $region19: #{tpu_custom_call.1} parent=11 // pred_region
          _
        $region20: #{tpu_custom_call.1} parent=11 // pred_fallthru
          _
      $region12: #{tpu_custom_call.1} parent=5 // pred_fallthru
        _
      %p173 = scmp.lt.s32.totalorder %s14, 2
      // Predicated region
      $region21: #{tpu_custom_call.1} parent=5 // pred_check
        %p174 = pneg %p173
      $region22: #{tpu_custom_call.1} parent=5 // pred_check_branch
        %176 = sbr.rel (%p174) target = $region24
      $region23: #{tpu_custom_call.1} parent=5 // pred_region
        // Predicated region
        $region25: #{tpu_custom_call.1} parent=23 // pred_check
          %p177 = pneg %p48
        $region26: #{tpu_custom_call.1} parent=23 // pred_check_branch
          %179 = sbr.rel (%p177) target = $region28
        $region27: #{tpu_custom_call.1} parent=23 // pred_region
          %s180 = sand.u32 %s38, 1
          %s181 = scalar_lea.sflag [#allocation3], %s180
          %s182 = sand.u32 %s38, 1
          %s183 = smul.addr %s182, 64
          %s184 = scalar_lea.vmem [#allocation2], %s183
          %s185 = smul.u32 2, %s22
          %s187 = ssub.s32 1024, 1024
          %188 = vsyncadd %s181, %s187
          %s189 = smul.addr %s21, 8
          %s190 = sadd.s32 %s185, %s189
          %s191 = smul.addr %s190, 128
          %s192 = scalar_lea.hbm %s0, %s191
          %s193 = sshll.u32 %s184, 4
          %s194 = int_to_ptr.vmem [resolvable:$true] %s193
          %199 = dma.hbm_to_vmem [thread:$0]  %s192, 1024, %s194, %s181, 256, 256, 16
        $region28: #{tpu_custom_call.1} parent=23 // pred_fallthru
          _
      $region24: #{tpu_custom_call.1} parent=5 // pred_fallthru
        _
      %p200 = scmp.le.s32.totalorder 1, %s14
      %p201 = scmp.lt.s32.totalorder %s14, 3
      %p202 = pnand %p200, %p201
      %p203 = pneg %p202
      // Predicated region
      $region29: #{tpu_custom_call.1} parent=5 // pred_check
        _
      $region30: #{tpu_custom_call.1} parent=5 // pred_check_branch
        %205 = sbr.rel (%p202) target = $region32
      $region31: #{tpu_custom_call.1} parent=5 // pred_region
        %s206 = ssub.s32 %s14, 1
        %s207 = sand.u32 %s41, 1
        %s208 = scalar_lea.sflag [#allocation3], %s207
        %s209 = sand.u32 %s41, 1
        %s210 = smul.addr %s209, 64
        %s211 = scalar_lea.vmem [#allocation2], %s210
        // Predicated region
        $region33: #{tpu_custom_call.1} parent=31 // pred_check
          %p212 = pneg %p54
        $region34: #{tpu_custom_call.1} parent=31 // pred_check_branch
          %214 = sbr.rel (%p212) target = $region36
        $region35: #{tpu_custom_call.1} parent=31 // pred_region
          %215 = dma.done %s208, 1024
        $region36: #{tpu_custom_call.1} parent=31 // pred_fallthru
          _
        %s216 = sand.u32 %s41, 1
        %s217 = scalar_lea.sflag [#allocation3], %s216
        %s218 = sand.u32 %s41, 1
        %s219 = smul.addr %s218, 64
        %s220 = scalar_lea.vmem [#allocation2], %s219
        %p221 = pneg %p54
        %p222 = pneg %p51
        %p223 = pneg %p75
        %p224 = pneg %p72
        %p225 = pneg %p96
        %p226 = pneg %p93
        %p227 = pneg %p124
        %p228 = pneg %p121
        %s229 = smul.u32 2, %s24
        %p230 = scmp.lt.s32.totalorder %s23, 1
        %s231 = scalar_select %p230, %s23, 1
        %p232 = scmp.lt.s32.totalorder %s229, 1
        %s233 = scalar_select %p232, %s229, 1
        %s234 = smul.addr %s231, 4
        %s235 = sadd.s32 %s233, %s234
        %s236 = smul.addr %s235, 8
        %s237 = scalar_lea.vmem %s3, %s236
        %p238 = pneg %p152
        %p239 = pneg %p149
        %s240 = smul.u32 2, %s24
        %p241 = scmp.lt.s32.totalorder %s23, 1
        %s242 = scalar_select %p241, %s23, 1
        %p243 = scmp.lt.s32.totalorder %s240, 1
        %s244 = scalar_select %p243, %s240, 1
        %s245 = smul.addr %s242, 4
        %s246 = sadd.s32 %s244, %s245
        %s247 = smul.addr %s246, 4
        %s248 = scalar_lea.vmem %s4, %s247
        %s249 = smul.u32 2, %s24
        %s250 = smul.u32 2, %s24
        %p251 = scmp.lt.s32.totalorder %s23, 1
        %s252 = scalar_select %p251, %s23, 1
        %p253 = scmp.lt.s32.totalorder %s250, 1
        %s254 = scalar_select %p253, %s250, 1
        %s255 = smul.addr %s252, 4
        %s256 = sadd.s32 %s254, %s255
        %s257 = smul.addr %s256, 8
        %s258 = scalar_lea.vmem %s3, %s257
        %s259 = smul.u32 2, %s24
        %s260 = smul.u32 2, %s24
        %p261 = scmp.lt.s32.totalorder %s23, 1
        %s262 = scalar_select %p261, %s23, 1
        %p263 = scmp.lt.s32.totalorder %s260, 1
        %s264 = scalar_select %p263, %s260, 1
        %s265 = smul.addr %s262, 4
        %s266 = sadd.s32 %s264, %s265
        %s267 = smul.addr %s266, 4
        %s268 = scalar_lea.vmem %s4, %s267
        %s269 = smul.u32 2, %s24
        %v271 = vld [vmem:[%s211] sm:$0xff]
        %v272 = vld [vmem:[%s211 + $0x8] sm:$0xff]
        %v273 = vld [vmem:[%s211 + $0x10] sm:$0xff]
        %v274 = vld [vmem:[%s211 + $0x18] sm:$0xff]
        %v275 = vld [vmem:[%s211 + $0x20] sm:$0xff]
        %v276 = vld [vmem:[%s211 + $0x28] sm:$0xff]
        %v277 = vld [vmem:[%s211 + $0x30] sm:$0xff]
        %v278 = vld [vmem:[%s211 + $0x38] sm:$0xff]
        %v279 = vpack.c.bf16 %v273, %v271
        %v280 = vpack.c.bf16 %v274, %v272
        %v281 = vpack.c.bf16 %v277, %v275
        %v282 = vpack.c.bf16 %v278, %v276
        %v283 = vld [vmem:[%s1] sm:$0xf]
        %v284 = vld [vmem:[%s1 + $0x4] sm:$0xf]
        %v285 = vld [vmem:[%s1 + $0x8] sm:$0xf]
        %v286 = vld [vmem:[%s2] sm:$0xff]
        %v287 = vld [vmem:[%s2 + $0x8] sm:$0xff]
        %v288 = vld [vmem:[%s2 + $0x10] sm:$0xff]
        %290 = vset.pattern.permute.xlu0 0
        %291 = vperm.xlu0 %290, %v286
        %v292 = vpop.permute.xlu0 %291
        %295 = vset.pattern.permute.xlu0 0
        %296 = vperm.xlu0 %295, %v287
        %v297 = vpop.permute.xlu0 %296
        %300 = vset.pattern.permute.xlu0 0
        %301 = vperm.xlu0 %300, %v288
        %v302 = vpop.permute.xlu0 %301
        %v307 = vunpack.c.l.b16 %v283
        %v308 = vunpack.c.l.b16 %v284
        %v309 = vunpack.c.l.b16 %v285
        %v310 = vpack.c.b16 %v308, %v307
        %v311 = vpack.c.b16 %v309, %v309
        %vm312 = vcmask 261120
        %v314 = vsel %vm312, %v310, 0
        %v317 = vsel %vm312, %v311, 0
        %319 = vmatprep.subr.bf16.mxu0 %v280
        %320 = vmatpush1.bf16.msra.mxu0 %v279
        %321 = vmatprep.subr.bf16.mxu0 %v282
        %322 = vmatpush1.bf16.msra.mxu0 %v281
        %323 = vmatprep.subr.bf16.mxu0 0
        %324 = vmatpush1.bf16.msra.mxu0 0
        %325 = vmatprep.subr.bf16.mxu0 0
        %326 = vmatpush1.bf16.msra.mxu0 0
        %327 = vmatprep.subr.bf16.mxu0 0
        %328 = vmatpush1.bf16.msra.mxu0 0
        %329 = vmatprep.subr.bf16.mxu0 0
        %330 = vmatpush1.bf16.msra.mxu0 0
        %331 = vmatprep.subr.bf16.mxu0 0
        %332 = vmatpush1.bf16.msra.mxu0 0
        %333 = vmatprep.subr.bf16.mxu0 0
        %334 = vmatpush1.bf16.msra.mxu0 0
        %335 = vmatprep.subr.bf16.mxu0 0
        %336 = vmatpush1.bf16.msra.mxu0 0
        %337 = vmatprep.subr.bf16.mxu0 0
        %338 = vmatpush1.bf16.msra.mxu0 0
        %339 = vmatprep.subr.bf16.mxu0 0
        %340 = vmatpush1.bf16.msra.mxu0 0
        %341 = vmatprep.subr.bf16.mxu0 0
        %342 = vmatpush1.bf16.msra.mxu0 0
        %343 = vmatprep.subr.bf16.mxu0 0
        %344 = vmatpush1.bf16.msra.mxu0 0
        %345 = vmatprep.subr.bf16.mxu0 0
        %346 = vmatpush1.bf16.msra.mxu0 0
        %347 = vmatprep.subr.bf16.mxu0 0
        %348 = vmatpush1.bf16.msra.mxu0 0
        %349 = vmatprep.subr.bf16.mxu0 0
        %350 = vmatpush1.bf16.msra.mxu0 0
        %351 = vmatprep.mubr.bf16.mxu0 0
        %352 = vmatmul.mubr.bf16.gmra.mrb[0].mxu0 %v314
        %v353 = vpop.f32.mrb[0].mxu0
        %v354 = vadd.f32 %v292, %v353
        %v355 = vpop.f32.mrb[0].mxu0
        %v356 = vadd.f32 %v292, %v355
        %v357 = vpop.f32.mrb[0].mxu0
        %v358 = vadd.f32 %v297, %v357
        %v359 = vpop.f32.mrb[0].mxu0
        %v360 = vadd.f32 %v297, %v359
        %361 = vmatprep.mubr.bf16.mxu0 0
        %362 = vmatmul.mubr.bf16.gmra.mrb[0].mxu0 %v317
        %v363 = vpop.f32.mrb[0].mxu0
        %v364 = vadd.f32 %v302, %v363
        %v365 = vpop.f32.mrb[0].mxu0
        %v366 = vadd.f32 %v302, %v365
        %v367 = vpop.f32.mrb[0].mxu0
        %v368 = vpop.f32.mrb[0].mxu0
        %369 = vdwg.mxu0
        %v370 = vxor.u32 %v354, 2147483648
        %v371 = vxor.u32 %v356, 2147483648
        %v372 = vxor.u32 %v358, 2147483648
        %v373 = vxor.u32 %v360, 2147483648
        %v374 = vxor.u32 %v364, 2147483648
        %v375 = vxor.u32 %v366, 2147483648
        %v376 = vmul.f32 %v370, 1.442695
        %v377 = vpow.pop %v376
        %v378 = vmul.f32 %v371, 1.442695
        %v379 = vpow.pop %v378
        %v380 = vmul.f32 %v372, 1.442695
        %v381 = vpow.pop %v380
        %v382 = vmul.f32 %v373, 1.442695
        %v383 = vpow.pop %v382
        %v384 = vmul.f32 %v374, 1.442695
        %v385 = vpow.pop %v384
        %v386 = vmul.f32 %v375, 1.442695
        %v387 = vpow.pop %v386
        %v388 = vadd.f32 %v377, 1.0
        %v389 = vadd.f32 %v379, 1.0
        %v390 = vadd.f32 %v381, 1.0
        %v391 = vadd.f32 %v383, 1.0
        %v392 = vadd.f32 %v385, 1.0
        %v393 = vadd.f32 %v387, 1.0
        %v394 = vrcp.pop %v388
        %v395 = vmul.f32 1.0, %v394
        %v396 = vrcp.pop %v389
        %v397 = vmul.f32 1.0, %v396
        %v398 = vrcp.pop %v390
        %v399 = vmul.f32 1.0, %v398
        %v400 = vrcp.pop %v391
        %v401 = vmul.f32 1.0, %v400
        %v402 = vrcp.pop %v392
        %v403 = vmul.f32 1.0, %v402
        %v404 = vrcp.pop %v393
        %v405 = vmul.f32 1.0, %v404
        %v406 = vlaneseq
        %v407 = vand.u32 %v406, 127
        %v408 = vadd.s32 %v407, 128
        %s409 = smul.u32 %s24, 256
        %v410 = vstv %s409
        %v411 = vadd.s32 %v407, %v410
        %v412 = vadd.s32 %v408, %v410
        %v413 = vcvt.s32.f32 %v411
        %v414 = vcvt.s32.f32 %v412
        %v415 = vadd.f32 %v413, 0.5
        %v416 = vadd.f32 %v414, 0.5
        %v417 = vmul.f32 %v415, 0.0625
        %v418 = vmul.f32 %v416, 0.0625
        %v419 = vfloor.f32 %v417
        %v420 = vfloor.f32 %v418
        %v421 = vmul.f32 %v419, 16.0
        %v422 = vmul.f32 %v420, 16.0
        %v423 = vsub.f32 %v413, %v421
        %v424 = vsub.f32 %v414, %v422
        %v425 = vadd.f32 %v395, %v423
        %v426 = vadd.f32 %v397, %v424
        %v427 = vmul.f32 %v425, 8.0
        %v428 = vmul.f32 %v426, 8.0
        %v429 = vadd.f32 %v395, %v419
        %v430 = vadd.f32 %v397, %v420
        %v431 = vmul.f32 %v429, 8.0
        %v432 = vmul.f32 %v430, 8.0
        %v433 = vmul.f32 %v354, 1.442695
        %v434 = vpow.pop %v433
        %v435 = vmul.f32 %v356, 1.442695
        %v436 = vpow.pop %v435
        %v437 = vmul.f32 %v434, 5.0
        %v438 = vmul.f32 %v436, 5.0
        %v439 = vmul.f32 %v434, 6.5
        %v440 = vmul.f32 %v436, 6.5
        %v443 = vrot.slane %v437, 2
        %v444 = vrot.slane %v438, 2
        %v447 = vsub.f32 %v427, %v443
        %v448 = vsub.f32 %v428, %v444
        %v451 = vrot.slane %v439, 2
        %v452 = vrot.slane %v440, 2
        %v455 = vsub.f32 %v431, %v451
        %v456 = vsub.f32 %v432, %v452
        %v457 = vadd.f32 %v427, %v443
        %v458 = vadd.f32 %v428, %v444
        %v459 = vadd.f32 %v431, %v451
        %v460 = vadd.f32 %v432, %v452
        %v461 = vadd.f32 %v399, %v423
        %v462 = vadd.f32 %v401, %v424
        %v463 = vmul.f32 %v461, 8.0
        %v464 = vmul.f32 %v462, 8.0
        %v465 = vadd.f32 %v399, %v419
        %v466 = vadd.f32 %v401, %v420
        %v467 = vmul.f32 %v465, 8.0
        %v468 = vmul.f32 %v466, 8.0
        %v469 = vmul.f32 %v358, 1.442695
        %v470 = vpow.pop %v469
        %v471 = vmul.f32 %v360, 1.442695
        %v472 = vpow.pop %v471
        %v473 = vmul.f32 %v470, 8.0
        %v474 = vmul.f32 %v472, 8.0
        %v475 = vmul.f32 %v470, 15.0
        %v476 = vmul.f32 %v472, 15.0
        %v479 = vrot.slane %v473, 2
        %v480 = vrot.slane %v474, 2
        %v483 = vsub.f32 %v463, %v479
        %v484 = vsub.f32 %v464, %v480
        %v487 = vrot.slane %v475, 2
        %v488 = vrot.slane %v476, 2
        %v491 = vsub.f32 %v467, %v487
        %v492 = vsub.f32 %v468, %v488
        %v493 = vadd.f32 %v463, %v479
        %v494 = vadd.f32 %v464, %v480
        %v495 = vadd.f32 %v467, %v487
        %v496 = vadd.f32 %v468, %v488
        %v497 = vadd.f32 %v403, %v423
        %v498 = vadd.f32 %v405, %v424
        %v499 = vmul.f32 %v497, 8.0
        %v500 = vmul.f32 %v498, 8.0
        %v501 = vadd.f32 %v403, %v419
        %v502 = vadd.f32 %v405, %v420
        %v503 = vmul.f32 %v501, 8.0
        %v504 = vmul.f32 %v502, 8.0
        %v505 = vmul.f32 %v364, 1.442695
        %v506 = vpow.pop %v505
        %v507 = vmul.f32 %v366, 1.442695
        %v508 = vpow.pop %v507
        %v509 = vmul.f32 %v506, 16.5
        %v510 = vmul.f32 %v508, 16.5
        %v511 = vmul.f32 %v506, 11.5
        %v512 = vmul.f32 %v508, 11.5
        %v515 = vrot.slane %v509, 2
        %v516 = vrot.slane %v510, 2
        %v519 = vsub.f32 %v499, %v515
        %v520 = vsub.f32 %v500, %v516
        %v523 = vrot.slane %v511, 2
        %v524 = vrot.slane %v512, 2
        %v527 = vsub.f32 %v503, %v523
        %v528 = vsub.f32 %v504, %v524
        %v529 = vadd.f32 %v499, %v515
        %v530 = vadd.f32 %v500, %v516
        %v531 = vadd.f32 %v503, %v523
        %v532 = vadd.f32 %v504, %v524
        %v535 = vrot.slane %v457, 6
        %v536 = vrot.slane %v458, 6
        %v541 = vrot.slane %v459, 6
        %v542 = vrot.slane %v460, 6
        %v547 = vrot.slane %v483, 4
        %v548 = vrot.slane %v484, 4
        %v553 = vrot.slane %v491, 4
        %v554 = vrot.slane %v492, 4
        %v559 = vrot.slane %v493, 2
        %v560 = vrot.slane %v494, 2
        %v565 = vrot.slane %v495, 2
        %v566 = vrot.slane %v496, 2
        %v571 = vrot.slane %v529, 6
        %v572 = vrot.slane %v530, 6
        %v577 = vrot.slane %v531, 6
        %v578 = vrot.slane %v532, 6
        %vm581 = vcmask 1040384
        %v582 = vsel %vm581, %v447, %v455
        %v583 = vsel %vm581, %v448, %v456
        %vm584 = vcmask 1041408
        %v585 = vsel %vm584, %v582, %v535
        %v586 = vsel %vm584, %v583, %v536
        %vm587 = vcmask 1042432
        %v588 = vsel %vm587, %v585, %v541
        %v589 = vsel %vm587, %v586, %v542
        %vm590 = vcmask 1043456
        %v591 = vsel %vm590, %v588, %v547
        %v592 = vsel %vm590, %v589, %v548
        %vm593 = vcmask 1044480
        %v594 = vsel %vm593, %v591, %v553
        %v595 = vsel %vm593, %v592, %v554
        %vm596 = vcmask 1045504
        %v597 = vsel %vm596, %v594, %v559
        %v598 = vsel %vm596, %v595, %v560
        %vm599 = vcmask 1046528
        %v600 = vsel %vm599, %v597, %v565
        %v601 = vsel %vm599, %v598, %v566
        %v602 = vsel %vm581, %v519, %v527
        %v603 = vsel %vm581, %v520, %v528
        %v604 = vsel %vm584, %v602, %v571
        %v605 = vsel %vm584, %v603, %v572
        %v606 = vsel %vm587, %v604, %v577
        %v607 = vsel %vm587, %v605, %v578
        %608 = vst [vmem:[%s258] sm:$0xff] %v600
        %609 = vst [vmem:[%s258 + $0x8] sm:$0xff] %v601
        %610 = vst [vmem:[%s258 + $0x10] sm:$0xf] %v606
        %611 = vst [vmem:[%s258 + $0x18] sm:$0xf] %v607
        %v614 = vrot.slane %v395, 4
        %v615 = vrot.slane %v397, 4
        %v620 = vrot.slane %v399, 3
        %v621 = vrot.slane %v401, 3
        %v626 = vrot.slane %v403, 2
        %v627 = vrot.slane %v405, 2
        %v630 = vrot.slane %v395, 2
        %v631 = vrot.slane %v397, 2
        %v634 = vrot.slane %v399, 7
        %v635 = vrot.slane %v401, 7
        %v638 = vrot.slane %v403, 4
        %v639 = vrot.slane %v405, 4
        %v642 = vsel %vm581, %v614, %v620
        %v643 = vsel %vm581, %v615, %v621
        %v644 = vsel %vm584, %v642, %v626
        %v645 = vsel %vm584, %v643, %v627
        %v646 = vsel %vm587, %v644, %v630
        %v647 = vsel %vm587, %v645, %v631
        %v648 = vsel %vm596, %v646, %v634
        %v649 = vsel %vm596, %v647, %v635
        %v650 = vsel %vm581, %v634, %v638
        %v651 = vsel %vm581, %v635, %v639
        %v652 = vpack.c.bf16 %v650, %v648
        %v653 = vpack.c.bf16 %v651, %v649
        %v656 = vunpack.c.l.b16 %v652
        %v657 = vunpack.c.l.b16 %v653
        %v658 = vunpack.c.h.b16 %v652
        %v659 = vunpack.c.h.b16 %v653
        %v660 = vpack.c.b16 %v657, %v656
        %v661 = vpack.c.b16 %v659, %v658
        %664 = vst [vmem:[%s268] sm:$0xff] %v660
        %665 = vst [vmem:[%s268 + $0x8] sm:$0x33] %v661
        %s666 = smul.u32 2, %s24
        %p667 = scmp.lt.s32.totalorder %s23, 1
        %s668 = scalar_select %p667, %s23, 1
        %p669 = scmp.lt.s32.totalorder %s666, 1
        %s670 = scalar_select %p669, %s666, 1
        %s671 = smul.addr %s668, 4
        %s672 = sadd.s32 %s670, %s671
        %s673 = smul.addr %s672, 8
        %s674 = scalar_lea.vmem %s3, %s673
        %s675 = smul.u32 2, %s24
        %p676 = scmp.lt.s32.totalorder %s23, 1
        %s677 = scalar_select %p676, %s23, 1
        %p678 = scmp.lt.s32.totalorder %s675, 1
        %s679 = scalar_select %p678, %s675, 1
        %s680 = smul.addr %s677, 4
        %s681 = sadd.s32 %s679, %s680
        %s682 = smul.addr %s681, 4
        %s683 = scalar_lea.vmem %s4, %s682
        // Predicated region
        $region37: #{tpu_custom_call.1} parent=31 // pred_check
          %p684 = pneg %p121
        $region38: #{tpu_custom_call.1} parent=31 // pred_check_branch
          %686 = sbr.rel (%p684) target = $region40
        $region39: #{tpu_custom_call.1} parent=31 // pred_region
          %s687 = smul.u32 2, %s24
        $region40: #{tpu_custom_call.1} parent=31 // pred_fallthru
          _
        // Predicated region
        $region41: #{tpu_custom_call.1} parent=31 // pred_check
          %p688 = pneg %p149
        $region42: #{tpu_custom_call.1} parent=31 // pred_check_branch
          %690 = sbr.rel (%p688) target = $region44
        $region43: #{tpu_custom_call.1} parent=31 // pred_region
          %s691 = smul.u32 2, %s24
        $region44: #{tpu_custom_call.1} parent=31 // pred_fallthru
          _
      $region32: #{tpu_custom_call.1} parent=5 // pred_fallthru
        _
      %p692 = scmp.le.s32.totalorder 2, %s14
      // Predicated region
      $region45: #{tpu_custom_call.1} parent=5 // pred_check
        %p693 = pneg %p692
      $region46: #{tpu_custom_call.1} parent=5 // pred_check_branch
        %695 = sbr.rel (%p693) target = $region48
      $region47: #{tpu_custom_call.1} parent=5 // pred_region
        %s696 = ssub.s32 %s14, 2
        // Predicated region
        $region49: #{tpu_custom_call.1} parent=47 // pred_check
          %p697 = pneg %p127
        $region50: #{tpu_custom_call.1} parent=47 // pred_check_branch
          %699 = sbr.rel (%p697) target = $region52
        $region51: #{tpu_custom_call.1} parent=47 // pred_region
          %s700 = smul.u32 2, %s26
          %p701 = scmp.lt.s32.totalorder %s25, 1
          %s702 = scalar_select %p701, %s25, 1
          %p703 = scmp.lt.s32.totalorder %s700, 1
          %s704 = scalar_select %p703, %s700, 1
          %s705 = smul.addr %s702, 4
          %s706 = sadd.s32 %s704, %s705
          %s707 = smul.addr %s706, 8
          %s708 = scalar_lea.vmem %s3, %s707
        $region52: #{tpu_custom_call.1} parent=47 // pred_fallthru
          _
        // Predicated region
        $region53: #{tpu_custom_call.1} parent=47 // pred_check
          %p709 = pneg %p155
        $region54: #{tpu_custom_call.1} parent=47 // pred_check_branch
          %711 = sbr.rel (%p709) target = $region56
        $region55: #{tpu_custom_call.1} parent=47 // pred_region
          %s712 = smul.u32 2, %s26
          %p713 = scmp.lt.s32.totalorder %s25, 1
          %s714 = scalar_select %p713, %s25, 1
          %p715 = scmp.lt.s32.totalorder %s712, 1
          %s716 = scalar_select %p715, %s712, 1
          %s717 = smul.addr %s714, 4
          %s718 = sadd.s32 %s716, %s717
          %s719 = smul.addr %s718, 4
          %s720 = scalar_lea.vmem %s4, %s719
        $region56: #{tpu_custom_call.1} parent=47 // pred_fallthru
          _
      $region48: #{tpu_custom_call.1} parent=5 // pred_fallthru
        _
    $region6: #{tpu_custom_call.1} parent=1 // loop_footer
      %s18 = sadd.s32 1, %s14
    $region7: #{tpu_custom_call.1} parent=1 // loop_footer_branch
      %13 = sbr.rel target = $region3
    $region8: #{tpu_custom_call.1} parent=1 // loop_exit
      _
    %721 = vsyncpa [#allocation3], 1
    %s722 = scalar_lea.sflag [#allocation3], 1
    %723 = vsyncpa %s722, 1

</llo_original>
